<compile_context>
chip_gen: v7x
topology: tpu7x:2x2x1
jax: 0.10.0
libtpu: 0.0.40
codegen_flags: <defaults>
</compile_context>

<pallas_src>
import functools

import jax
import jax.numpy as jnp
from jax.experimental import pallas as pl
from jax.experimental.pallas import tpu as pltpu


def _round_up(n: int, m: int) -> int:
    return (n + m - 1) // m * m


def _mlp_kernel(xT_ref, w1_ref, b1_ref, w2_ref, b2_ref, o_ref):
    """One batch tile. xT_ref: (in_p, TM); o_ref: (out_p, TM); batch on lanes."""
    xT = xT_ref[...]                                           # (in_p, TM)
    # Layer 1: (hid_p, in_p) @ (in_p, TM) -> (hid_p, TM), f32 accumulation.
    h = jnp.dot(w1_ref[...], xT, preferred_element_type=jnp.float32)
    h = h + b1_ref[...]                # (hid_p, 1) broadcast across lanes, f32
    h = jnp.maximum(h, 0.01 * h)       # LeakyReLU(0.01), f32 VPU math
    # Layer 2: (out_p, hid_p) @ (hid_p, TM) -> (out_p, TM)
    y = jnp.dot(w2_ref[...], h.astype(w2_ref.dtype),
                preferred_element_type=jnp.float32)
    y = y + b2_ref[...]
    y = jnp.maximum(y, 0.01 * y)       # LeakyReLU(0.01)
    o_ref[...] = y.astype(o_ref.dtype)


@functools.partial(jax.jit, static_argnames=("block_batch", "io_dtype"))
def neural_network_forward(x, w1, b1, w2, b2, *, block_batch=512,
                           io_dtype=None):
    """y = leaky_relu(leaky_relu(x @ w1 + b1) @ w2 + b2); w stored (in, out)."""
    if io_dtype is None:
        io_dtype = jnp.float32
    B, in_f = x.shape
    hid_f = w1.shape[1]
    out_f = w2.shape[1]

    # Sublane-friendly padded feature dims (zero padding contributes nothing).
    in_p = _round_up(in_f, 8)          # 8
    hid_p = _round_up(hid_f, 8)        # 16
    out_p = _round_up(out_f, 8)        # 8

    # Lane-dense batch tile (multiple of 128); big tiles amortize per-step cost.
    tm = max(128, min(_round_up(block_batch, 128), _round_up(B, 128)))
    b_pad = _round_up(B, tm)
    n_blocks = b_pad // tm

    f32 = jnp.float32
    # Wrapper-side layout plumbing: transpose + zero-pad operands once.
    xT = jnp.zeros((in_p, b_pad), io_dtype).at[:in_f, :B].set(
        x.T.astype(io_dtype))
    w1t = jnp.zeros((hid_p, in_p), io_dtype).at[:hid_f, :in_f].set(
        w1.T.astype(io_dtype))
    w2t = jnp.zeros((out_p, hid_p), io_dtype).at[:out_f, :hid_f].set(
        w2.T.astype(io_dtype))
    b1c = jnp.zeros((hid_p, 1), f32).at[:hid_f, 0].set(b1.astype(f32))
    b2c = jnp.zeros((out_p, 1), f32).at[:out_f, 0].set(b2.astype(f32))

    io_bytes = jnp.dtype(io_dtype).itemsize
    cost = pl.CostEstimate(
        flops=2 * b_pad * (in_p * hid_p + hid_p * out_p),
        transcendentals=0,
        bytes_accessed=int(
            in_p * b_pad * io_bytes                 # streamed xT read
            + out_p * b_pad * 4                     # streamed yT write (f32)
            + (hid_p * in_p + out_p * hid_p) * io_bytes
            + (hid_p + out_p) * 4),
    )

    resident = lambda shape: pl.BlockSpec(shape, lambda i: (0, 0))
    yT = pl.pallas_call(
        _mlp_kernel,
        out_shape=jax.ShapeDtypeStruct((out_p, b_pad), f32),
        grid=(n_blocks,),
        in_specs=[
            pl.BlockSpec((in_p, tm), lambda i: (0, i)),   # streamed x tile
            resident((hid_p, in_p)),                      # W1^T (VMEM-resident)
            resident((hid_p, 1)),                         # b1
            resident((out_p, hid_p)),                     # W2^T
            resident((out_p, 1)),                         # b2
        ],
        out_specs=pl.BlockSpec((out_p, tm), lambda i: (0, i)),
        compiler_params=pltpu.CompilerParams(
            dimension_semantics=("parallel",)),
        cost_estimate=cost,
    )(xT, w1t, b1c, w2t, b2c)

    # Strip feature/batch padding, return (B, out_features) in f32.
    return yT[:out_f, :B].T


def _init_params(key):
    # Deterministic init mimicking nn.Linear's uniform(-1/sqrt(fan_in), ...).
    k1, k2, k3, k4 = jax.random.split(key, 4)
    bound1 = 1.0 / jnp.sqrt(8.0)
    bound2 = 1.0 / jnp.sqrt(10.0)
    w1 = jax.random.uniform(k1, (8, 10), jnp.float32, -bound1, bound1)
    b1 = jax.random.uniform(k2, (10,), jnp.float32, -bound1, bound1)
    w2 = jax.random.uniform(k3, (10, 5), jnp.float32, -bound2, bound2)
    b2 = jax.random.uniform(k4, (5,), jnp.float32, -bound2, bound2)
    return w1, b1, w2, b2


def _reference(x, w1, b1, w2, b2):
    h = x @ w1 + b1
    h = jnp.where(h >= 0, h, 0.01 * h)
    y = h @ w2 + b2
    return jnp.where(y >= 0, y, 0.01 * y)


if __name__ == "__main__":
    key = jax.random.PRNGKey(0)
    kx, kp = jax.random.split(key)
    w1, b1, w2, b2 = _init_params(kp)

    # Small test (single grid step), f32 path.
    B = 8
    x = jax.random.normal(kx, (B, 8), jnp.float32)
    out = jax.block_until_ready(neural_network_forward(x, w1, b1, w2, b2))
    ref = _reference(x, w1, b1, w2, b2)
    assert out.shape == (B, 5)
    assert jnp.allclose(out, ref, atol=1e-5, rtol=1e-5)

    # Multi-tile grid + non-multiple batch (exercises padding/slicing), f32.
    B2 = 1000
    x2 = jax.random.normal(jax.random.PRNGKey(1), (B2, 8), jnp.float32)
    out2 = jax.block_until_ready(
        neural_network_forward(x2, w1, b1, w2, b2, block_batch=256))
    ref2 = _reference(x2, w1, b1, w2, b2)
    assert out2.shape == (B2, 5)
    assert jnp.allclose(out2, ref2, atol=1e-5, rtol=1e-5)

    # bf16 HBM traffic path (x / weights in bf16, f32 activation math).
    out3 = jax.block_until_ready(
        neural_network_forward(x2, w1, b1, w2, b2, io_dtype=jnp.bfloat16))
    assert out3.shape == (B2, 5)
    assert jnp.allclose(out3, ref2, atol=1e-1, rtol=1e-1)

    print("KERNEL_OK")
</pallas_src>

<mosaic_0001>
module attributes {stable_mosaic.version = 11 : i64} {
  func.func @_mlp_kernel(%arg0: i32, %arg1: memref<8x128xf32, #tpu.memory_space<vmem>>, %arg2: memref<16x8xf32, #tpu.memory_space<vmem>>, %arg3: memref<16x1xf32, #tpu.memory_space<vmem>>, %arg4: memref<8x16xf32, #tpu.memory_space<vmem>>, %arg5: memref<8x1xf32, #tpu.memory_space<vmem>>, %arg6: memref<8x128xf32, #tpu.memory_space<vmem>>) attributes {dimension_semantics = [#tpu.dimension_semantics<parallel>], iteration_bounds = array<i64: 1>, scalar_prefetch = 0 : i64, scratch_operands = 0 : i64, tpu.core_type = #tpu.core_type<tc>, window_params = [{transform_indices = @transform_0, window_bounds = array<i64: 8, 128>}, {pipeline_mode = #tpu.pipeline_mode<synchronous>, transform_indices = @transform_1, window_bounds = array<i64: 16, 8>}, {pipeline_mode = #tpu.pipeline_mode<synchronous>, transform_indices = @transform_2, window_bounds = array<i64: 16, 1>}, {pipeline_mode = #tpu.pipeline_mode<synchronous>, transform_indices = @transform_3, window_bounds = array<i64: 8, 16>}, {pipeline_mode = #tpu.pipeline_mode<synchronous>, transform_indices = @transform_4, window_bounds = array<i64: 8, 1>}, {transform_indices = @transform_5, window_bounds = array<i64: 8, 128>}]} {
    %c0 = arith.constant 0 : index
    %c0_0 = arith.constant 0 : index
    %0 = vector.load %arg1[%c0, %c0_0] : memref<8x128xf32, #tpu.memory_space<vmem>>, vector<8x128xf32>
    %c0_1 = arith.constant 0 : index
    %c0_2 = arith.constant 0 : index
    %1 = vector.load %arg2[%c0_1, %c0_2] : memref<16x8xf32, #tpu.memory_space<vmem>>, vector<16x8xf32>
    %cst = arith.constant dense<0.000000e+00> : vector<16x128xf32>
    %2 = tpu.matmul %1, %0, %cst {dimension_numbers = #tpu.dot_dimension_numbers<[1], [0], [0], [1], [0, 0, 1, 1], [], []>} : vector<16x8xf32>, vector<8x128xf32>, vector<16x128xf32> -> vector<16x128xf32>
    %c0_3 = arith.constant 0 : index
    %c0_4 = arith.constant 0 : index
    %3 = vector.load %arg3[%c0_3, %c0_4] : memref<16x1xf32, #tpu.memory_space<vmem>>, vector<16x1xf32>
    %4 = vector.broadcast %3 : vector<16x1xf32> to vector<16x128xf32>
    %5 = arith.addf %2, %4 : vector<16x128xf32>
    %cst_5 = arith.constant 0.00999999977 : f32
    %6 = vector.broadcast %cst_5 : f32 to vector<16x128xf32>
    %7 = arith.mulf %6, %5 : vector<16x128xf32>
    %8 = arith.maximumf %5, %7 : vector<16x128xf32>
    %c0_6 = arith.constant 0 : index
    %c0_7 = arith.constant 0 : index
    %9 = vector.load %arg4[%c0_6, %c0_7] : memref<8x16xf32, #tpu.memory_space<vmem>>, vector<8x16xf32>
    %cst_8 = arith.constant dense<0.000000e+00> : vector<8x128xf32>
    %10 = tpu.matmul %9, %8, %cst_8 {dimension_numbers = #tpu.dot_dimension_numbers<[1], [0], [0], [1], [0, 0, 1, 1], [], []>} : vector<8x16xf32>, vector<16x128xf32>, vector<8x128xf32> -> vector<8x128xf32>
    %c0_9 = arith.constant 0 : index
    %c0_10 = arith.constant 0 : index
    %11 = vector.load %arg5[%c0_9, %c0_10] : memref<8x1xf32, #tpu.memory_space<vmem>>, vector<8x1xf32>
    %12 = vector.broadcast %11 : vector<8x1xf32> to vector<8x128xf32>
    %13 = arith.addf %10, %12 : vector<8x128xf32>
    %cst_11 = arith.constant 0.00999999977 : f32
    %14 = vector.broadcast %cst_11 : f32 to vector<8x128xf32>
    %15 = arith.mulf %14, %13 : vector<8x128xf32>
    %16 = arith.maximumf %13, %15 : vector<8x128xf32>
    %c0_12 = arith.constant 0 : index
    %c0_13 = arith.constant 0 : index
    %17 = vector.load %arg6[%c0_12, %c0_13] : memref<8x128xf32, #tpu.memory_space<vmem>>, vector<8x128xf32>
    tpu.vector_store %arg6[%c0_12, %c0_13], %16 {strides = array<i32>} : memref<8x128xf32, #tpu.memory_space<vmem>>, vector<8x128xf32>,
    return
  }
  func.func @transform_0(%arg0: i32) -> (i32, i32) {
    %c0_i32 = arith.constant 0 : i32
    %c0_i32_0 = arith.constant 0 : i32
    return %c0_i32, %arg0 : i32, i32
  }
  func.func @transform_1(%arg0: i32) -> (i32, i32) {
    %c0_i32 = arith.constant 0 : i32
    %c0_i32_0 = arith.constant 0 : i32
    %c0_i32_1 = arith.constant 0 : i32
    return %c0_i32, %c0_i32_0 : i32, i32
  }
  func.func @transform_2(%arg0: i32) -> (i32, i32) {
    %c0_i32 = arith.constant 0 : i32
    %c0_i32_0 = arith.constant 0 : i32
    %c0_i32_1 = arith.constant 0 : i32
    return %c0_i32, %c0_i32_0 : i32, i32
  }
  func.func @transform_3(%arg0: i32) -> (i32, i32) {
    %c0_i32 = arith.constant 0 : i32
    %c0_i32_0 = arith.constant 0 : i32
    %c0_i32_1 = arith.constant 0 : i32
    return %c0_i32, %c0_i32_0 : i32, i32
  }
  func.func @transform_4(%arg0: i32) -> (i32, i32) {
    %c0_i32 = arith.constant 0 : i32
    %c0_i32_0 = arith.constant 0 : i32
    %c0_i32_1 = arith.constant 0 : i32
    return %c0_i32, %c0_i32_0 : i32, i32
  }
  func.func @transform_5(%arg0: i32) -> (i32, i32) {
    %c0_i32 = arith.constant 0 : i32
    %c0_i32_0 = arith.constant 0 : i32
    return %c0_i32, %arg0 : i32, i32
  }
}

</mosaic_0001>

<llo_original>
// kernel: neural_network_forward.1
$region0: #{neural_network_forward.1}
  #allocation0 [shape = 'u32[]', space=smem, size = 0x4, offset = 0x4, fixed_abs, tag = 'smem constant byte address 0x4 - core index']
  #allocation1 [shape = 'u32[144,128]{1,0:T(1,128)}', space=vmem, size = 0x12000, scoped, tag = 'internal scratch']
  %s0 = inlined_call_operand.vmem [shape: f32[8,128], index: 0, kind: input, shape index: {}]
  %s1 = inlined_call_operand.vmem [shape: f32[16,8], index: 1, kind: input, shape index: {}]
  %s2 = inlined_call_operand.vmem [shape: f32[16,1], index: 2, kind: input, shape index: {}]
  %s3 = inlined_call_operand.vmem [shape: f32[8,16], index: 3, kind: input, shape index: {}]
  %s4 = inlined_call_operand.vmem [shape: f32[8,1], index: 4, kind: input, shape index: {}]
  %s5 = inlined_call_operand.vmem [shape: f32[8,128], index: 5, kind: output, shape index: {}]
  %s6 = sld [smem:[#allocation0]]
  $region30: #{neural_network_forward.1} parent=0
    _
  %s8 = ssub.s32 1, %s6
  %s9 = scalar_select 0, %s8, %s6
  // Predicated region
  $region2: #{neural_network_forward.1} parent=0 // pred_check
    _
  $region3: #{neural_network_forward.1} parent=0 // pred_check_branch
    %11 = sbr.rel (0) target = $region5
  $region4: #{neural_network_forward.1} parent=0 // pred_region
    _
  $region5: #{neural_network_forward.1} parent=0 // pred_fallthru
    _
  // Predicated region
  $region6: #{neural_network_forward.1} parent=0 // pred_check
    _
  $region7: #{neural_network_forward.1} parent=0 // pred_check_branch
    %13 = sbr.rel (0) target = $region9
  $region8: #{neural_network_forward.1} parent=0 // pred_region
    _
  $region9: #{neural_network_forward.1} parent=0 // pred_fallthru
    _
  // Predicated region
  $region10: #{neural_network_forward.1} parent=0 // pred_check
    _
  $region11: #{neural_network_forward.1} parent=0 // pred_check_branch
    %15 = sbr.rel (0) target = $region13
  $region12: #{neural_network_forward.1} parent=0 // pred_region
    _
  $region13: #{neural_network_forward.1} parent=0 // pred_fallthru
    _
  // Predicated region
  $region14: #{neural_network_forward.1} parent=0 // pred_check
    _
  $region15: #{neural_network_forward.1} parent=0 // pred_check_branch
    %17 = sbr.rel (0) target = $region17
  $region16: #{neural_network_forward.1} parent=0 // pred_region
    _
  $region17: #{neural_network_forward.1} parent=0 // pred_fallthru
    _
  // Predicated region
  $region18: #{neural_network_forward.1} parent=0 // pred_check
    _
  $region19: #{neural_network_forward.1} parent=0 // pred_check_branch
    %19 = sbr.rel (0) target = $region21
  $region20: #{neural_network_forward.1} parent=0 // pred_region
    _
  $region21: #{neural_network_forward.1} parent=0 // pred_fallthru
    _
  %v20 = vld [vmem:[%s0] sm:$0xff]
  %v21 = vld [vmem:[%s1] sm:$0xff]
  %v22 = vld [vmem:[%s1 + $0x8] sm:$0xff]
  %v23 = vld [vmem:[%s2] sm:$0xff]
  %v24 = vld [vmem:[%s2 + $0x8] sm:$0xff]
  %26 = vset.pattern.permute.xlu0 0
  %27 = vperm.xlu0 %26, %v23
  %v28 = vpop.permute.xlu0 %27
  %31 = vset.pattern.permute.xlu0 0
  %32 = vperm.xlu0 %31, %v24
  %v33 = vpop.permute.xlu0 %32
  %vm35 = vcmask 64512
  %v37 = vsel %vm35, %v21, 0
  %v40 = vsel %vm35, %v22, 0
  %42 = vmatprep.subr.mxu0 0.0
  %43 = vmatpush1.msra.mxu0 %v20
  %44 = vmatprep.subr.mxu0 0.0
  %45 = vmatpush1.msra.mxu0 0.0
  %46 = vmatprep.subr.mxu0 0.0
  %47 = vmatpush1.msra.mxu0 0.0
  %48 = vmatprep.subr.mxu0 0.0
  %49 = vmatpush1.msra.mxu0 0.0
  %50 = vmatprep.subr.mxu0 0.0
  %51 = vmatpush1.msra.mxu0 0.0
  %52 = vmatprep.subr.mxu0 0.0
  %53 = vmatpush1.msra.mxu0 0.0
  %54 = vmatprep.subr.mxu0 0.0
  %55 = vmatpush1.msra.mxu0 0.0
  %56 = vmatprep.subr.mxu0 0.0
  %57 = vmatpush1.msra.mxu0 0.0
  %58 = vmatprep.subr.mxu0 0.0
  %59 = vmatpush1.msra.mxu0 0.0
  %60 = vmatprep.subr.mxu0 0.0
  %61 = vmatpush1.msra.mxu0 0.0
  %62 = vmatprep.subr.mxu0 0.0
  %63 = vmatpush1.msra.mxu0 0.0
  %64 = vmatprep.subr.mxu0 0.0
  %65 = vmatpush1.msra.mxu0 0.0
  %66 = vmatprep.subr.mxu0 0.0
  %67 = vmatpush1.msra.mxu0 0.0
  %68 = vmatprep.subr.mxu0 0.0
  %69 = vmatpush1.msra.mxu0 0.0
  %70 = vmatprep.subr.mxu0 0.0
  %71 = vmatpush1.msra.mxu0 0.0
  %72 = vmatprep.subr.mxu0 0.0
  %73 = vmatpush1.msra.mxu0 0.0
  %74 = vmatprep.subr.mxu0 0.0
  %75 = vmatpush1.msra.mxu0 0.0
  %76 = vmatprep.subr.mxu0 0.0
  %77 = vmatpush1.msra.mxu0 0.0
  %78 = vmatprep.subr.mxu0 0.0
  %79 = vmatpush1.msra.mxu0 0.0
  %80 = vmatprep.subr.mxu0 0.0
  %81 = vmatpush1.msra.mxu0 0.0
  %82 = vmatprep.subr.mxu0 0.0
  %83 = vmatpush1.msra.mxu0 0.0
  %84 = vmatprep.subr.mxu0 0.0
  %85 = vmatpush1.msra.mxu0 0.0
  %86 = vmatprep.subr.mxu0 0.0
  %87 = vmatpush1.msra.mxu0 0.0
  %88 = vmatprep.subr.mxu0 0.0
  %89 = vmatpush1.msra.mxu0 0.0
  %90 = vmatprep.subr.mxu0 0.0
  %91 = vmatpush1.msra.mxu0 0.0
  %92 = vmatprep.subr.mxu0 0.0
  %93 = vmatpush1.msra.mxu0 0.0
  %94 = vmatprep.subr.mxu0 0.0
  %95 = vmatpush1.msra.mxu0 0.0
  %96 = vmatprep.subr.mxu0 0.0
  %97 = vmatpush1.msra.mxu0 0.0
  %98 = vmatprep.subr.mxu0 0.0
  %99 = vmatpush1.msra.mxu0 0.0
  %100 = vmatprep.subr.mxu0 0.0
  %101 = vmatpush1.msra.mxu0 0.0
  %102 = vmatprep.subr.mxu0 0.0
  %103 = vmatpush1.msra.mxu0 0.0
  %104 = vmatprep.subr.mxu0 0.0
  %105 = vmatpush1.msra.mxu0 0.0
  %106 = vmatprep.mubr.f32.mxu0 0.0
  %107 = vmatmul.mubr.f32.gmra.mrb[0].mxu0 %v37
  %v108 = vpop.f32.mrb[0].mxu0
  %v109 = vadd.f32 %v28, %v108
  %v110 = vpop.f32.mrb[0].mxu0
  %111 = vmatprep.mubr.f32.mxu0 0.0
  %112 = vmatmul.mubr.f32.gmra.mrb[0].mxu0 %v40
  %v113 = vpop.f32.mrb[0].mxu0
  %v114 = vadd.f32 %v33, %v113
  %v115 = vpop.f32.mrb[0].mxu0
  %116 = vdwg.mxu0
  %v117 = vmul.f32 %v109, 0.01
  %v118 = vmul.f32 %v114, 0.01
  %v119 = vmax.f32 %v109, %v117
  %v120 = vmax.f32 %v114, %v118
  %v121 = vld [vmem:[%s3] sm:$0xff]
  %v122 = vld [vmem:[%s4] sm:$0xff]
  %124 = vset.pattern.permute.xlu0 0
  %125 = vperm.xlu0 %124, %v122
  %v126 = vpop.permute.xlu0 %125
  %vm128 = vcmask 130048
  %v130 = vsel %vm128, %v121, 0
  %132 = vmatprep.subr.mxu0 0.0
  %133 = vmatpush1.msra.mxu0 %v119
  %134 = vmatprep.subr.mxu0 0.0
  %135 = vmatpush1.msra.mxu0 %v120
  %136 = vmatprep.subr.mxu0 0.0
  %137 = vmatpush1.msra.mxu0 0.0
  %138 = vmatprep.subr.mxu0 0.0
  %139 = vmatpush1.msra.mxu0 0.0
  %140 = vmatprep.subr.mxu0 0.0
  %141 = vmatpush1.msra.mxu0 0.0
  %142 = vmatprep.subr.mxu0 0.0
  %143 = vmatpush1.msra.mxu0 0.0
  %144 = vmatprep.subr.mxu0 0.0
  %145 = vmatpush1.msra.mxu0 0.0
  %146 = vmatprep.subr.mxu0 0.0
  %147 = vmatpush1.msra.mxu0 0.0
  %148 = vmatprep.subr.mxu0 0.0
  %149 = vmatpush1.msra.mxu0 0.0
  %150 = vmatprep.subr.mxu0 0.0
  %151 = vmatpush1.msra.mxu0 0.0
  %152 = vmatprep.subr.mxu0 0.0
  %153 = vmatpush1.msra.mxu0 0.0
  %154 = vmatprep.subr.mxu0 0.0
  %155 = vmatpush1.msra.mxu0 0.0
  %156 = vmatprep.subr.mxu0 0.0
  %157 = vmatpush1.msra.mxu0 0.0
  %158 = vmatprep.subr.mxu0 0.0
  %159 = vmatpush1.msra.mxu0 0.0
  %160 = vmatprep.subr.mxu0 0.0
  %161 = vmatpush1.msra.mxu0 0.0
  %162 = vmatprep.subr.mxu0 0.0
  %163 = vmatpush1.msra.mxu0 0.0
  %164 = vmatprep.subr.mxu0 0.0
  %165 = vmatpush1.msra.mxu0 0.0
  %166 = vmatprep.subr.mxu0 0.0
  %167 = vmatpush1.msra.mxu0 0.0
  %168 = vmatprep.subr.mxu0 0.0
  %169 = vmatpush1.msra.mxu0 0.0
  %170 = vmatprep.subr.mxu0 0.0
  %171 = vmatpush1.msra.mxu0 0.0
  %172 = vmatprep.subr.mxu0 0.0
  %173 = vmatpush1.msra.mxu0 0.0
  %174 = vmatprep.subr.mxu0 0.0
  %175 = vmatpush1.msra.mxu0 0.0
  %176 = vmatprep.subr.mxu0 0.0
  %177 = vmatpush1.msra.mxu0 0.0
  %178 = vmatprep.subr.mxu0 0.0
  %179 = vmatpush1.msra.mxu0 0.0
  %180 = vmatprep.subr.mxu0 0.0
  %181 = vmatpush1.msra.mxu0 0.0
  %182 = vmatprep.subr.mxu0 0.0
  %183 = vmatpush1.msra.mxu0 0.0
  %184 = vmatprep.subr.mxu0 0.0
  %185 = vmatpush1.msra.mxu0 0.0
  %186 = vmatprep.subr.mxu0 0.0
  %187 = vmatpush1.msra.mxu0 0.0
  %188 = vmatprep.subr.mxu0 0.0
  %189 = vmatpush1.msra.mxu0 0.0
  %190 = vmatprep.subr.mxu0 0.0
  %191 = vmatpush1.msra.mxu0 0.0
  %192 = vmatprep.subr.mxu0 0.0
  %193 = vmatpush1.msra.mxu0 0.0
  %194 = vmatprep.subr.mxu0 0.0
  %195 = vmatpush1.msra.mxu0 0.0
  %196 = vmatprep.mubr.f32.mxu0 0.0
  %197 = vmatmul.mubr.f32.gmra.mrb[0].mxu0 %v130
  %v198 = vpop.f32.mrb[0].mxu0
  %v199 = vadd.f32 %v126, %v198
  %v200 = vpop.f32.mrb[0].mxu0
  %201 = vdwg.mxu0
  %v202 = vmul.f32 %v199, 0.01
  %v203 = vmax.f32 %v199, %v202
  %204 = vst [vmem:[%s5] sm:$0xff] %v203
  // Predicated region
  $region22: #{neural_network_forward.1} parent=0 // pred_check
    _
  $region23: #{neural_network_forward.1} parent=0 // pred_check_branch
    %206 = sbr.rel (0) target = $region25
  $region24: #{neural_network_forward.1} parent=0 // pred_region
    _
  $region25: #{neural_network_forward.1} parent=0 // pred_fallthru
    _
  // Predicated region
  $region26: #{neural_network_forward.1} parent=0 // pred_check
    _
  $region27: #{neural_network_forward.1} parent=0 // pred_check_branch
    %208 = sbr.rel (0) target = $region29
  $region28: #{neural_network_forward.1} parent=0 // pred_region
    _
  $region29: #{neural_network_forward.1} parent=0 // pred_fallthru
    _

</llo_original>
